<compile_context>
chip_gen: v7x
topology: tpu7x:2x2x1
jax: 0.10.0
libtpu: 0.0.40
codegen_flags: <defaults>
</compile_context>

<pallas_src>
import functools

import jax
import jax.numpy as jnp
from jax.experimental import pallas as pl
from jax.experimental.pallas import tpu as pltpu


EMBED_DIM = 256
H1, H2 = 128, 32
TASK_A_LABELS = 4
TASK_B_LABELS = 3
LANE = 128          # lane-dense padded width for layer-2/3 and the output
NORM_EPS = 1e-12


def _mtl_heads_kernel(x_ref, w1_ref, b1_ref, w2_ref, b2_ref, w3_ref, b3_ref, out_ref):
    # L2 normalize in f32 (backbone normalize=True); rsqrt uses the EUP slot.
    x = x_ref[...].astype(jnp.float32)
    inv_norm = jax.lax.rsqrt(jnp.sum(x * x, axis=-1, keepdims=True) + NORM_EPS)
    emb = (x * inv_norm).astype(w1_ref.dtype)

    # Fused heads.  Dropout == identity (eval mode).
    h = jnp.dot(emb, w1_ref[...], preferred_element_type=jnp.float32) + b1_ref[...]
    h = jnp.maximum(h, 0.0).astype(w2_ref.dtype)
    h = jnp.dot(h, w2_ref[...], preferred_element_type=jnp.float32) + b2_ref[...]
    h = jnp.maximum(h, 0.0).astype(w3_ref.dtype)
    logits = jnp.dot(h, w3_ref[...], preferred_element_type=jnp.float32) + b3_ref[...]
    out_ref[...] = logits.astype(out_ref.dtype)   # [tile_b, 128] lane-dense store


def pack_params(params, compute_dtype=jnp.bfloat16):
    """Fuse the two heads into 3 packed weights + 3 zero-padded biases."""
    (wA1, bA1, wA2, bA2, wA3, bA3, wB1, bB1, wB2, bB2, wB3, bB3) = params

    w1 = jnp.concatenate([wA1, wB1], axis=1)                        # [256, 256]
    b1 = jnp.concatenate([bA1, bB1], axis=1)                        # [1, 256]

    w2 = jnp.zeros((2 * H1, LANE), jnp.float32)                     # [256, 128]
    w2 = w2.at[:H1, :H2].set(wA2).at[H1:, H2:2 * H2].set(wB2)
    b2 = jnp.zeros((1, LANE), jnp.float32)
    b2 = b2.at[:, :H2].set(bA2).at[:, H2:2 * H2].set(bB2)

    w3 = jnp.zeros((LANE, LANE), jnp.float32)                       # [128, 128]
    w3 = w3.at[:H2, :TASK_A_LABELS].set(wA3)
    w3 = w3.at[H2:2 * H2, TASK_A_LABELS:TASK_A_LABELS + TASK_B_LABELS].set(wB3)
    b3 = jnp.zeros((1, LANE), jnp.float32)
    b3 = b3.at[:, :TASK_A_LABELS].set(bA3)
    b3 = b3.at[:, TASK_A_LABELS:TASK_A_LABELS + TASK_B_LABELS].set(bB3)

    cast = lambda w: w.astype(compute_dtype)
    # Weights in compute dtype (bf16 halves HBM bytes / doubles MXU rate); biases
    # stay f32 and are added to the f32 accumulator.
    return cast(w1), b1, cast(w2), b2, cast(w3), b3


@functools.partial(jax.jit, static_argnames=("tile_b", "compute_dtype"))
def multitask_forward(x, params, *, tile_b=256, compute_dtype=jnp.bfloat16):
    """x: [B, 256] raw backbone projection outputs. Returns (logitsA [B,4], logitsB [B,3])."""
    B, E = x.shape
    assert E == EMBED_DIM

    w1, b1, w2, b2, w3, b3 = pack_params(params, compute_dtype)

    # Batch tiling: pad B up instead of requiring divisibility (ragged batches OK).
    b_aligned = ((B + 7) // 8) * 8
    tile = max(8, min((tile_b // 8) * 8, b_aligned))
    num_tiles = pl.cdiv(b_aligned, tile)
    b_pad = num_tiles * tile
    if b_pad != B:
        x = jnp.pad(x, ((0, b_pad - B), (0, 0)))

    const2d = lambda *_: (0, 0)     # weights stay resident: same block every step

    out = pl.pallas_call(
        _mtl_heads_kernel,
        grid=(num_tiles,),
        in_specs=[
            pl.BlockSpec((tile, EMBED_DIM), lambda i: (i, 0)),  # x tiled over batch
            pl.BlockSpec(w1.shape, const2d),
            pl.BlockSpec(b1.shape, const2d),
            pl.BlockSpec(w2.shape, const2d),
            pl.BlockSpec(b2.shape, const2d),
            pl.BlockSpec(w3.shape, const2d),
            pl.BlockSpec(b3.shape, const2d),
        ],
        out_specs=pl.BlockSpec((tile, LANE), lambda i: (i, 0)),    # lane-dense output
        out_shape=jax.ShapeDtypeStruct((b_pad, LANE), jnp.float32),
        compiler_params=pltpu.CompilerParams(dimension_semantics=("parallel",)),
    )(x, w1, b1, w2, b2, w3, b3)

    logitsA = out[:B, :TASK_A_LABELS]
    logitsB = out[:B, TASK_A_LABELS:TASK_A_LABELS + TASK_B_LABELS]
    return logitsA, logitsB


def init_params(key):
    """Deterministic param init mimicking nn.Linear. Weights [in, out]; biases [1, out]."""
    def linear(k, fan_in, fan_out):
        kw, kb = jax.random.split(k)
        bound = 1.0 / jnp.sqrt(fan_in)
        w = jax.random.uniform(kw, (fan_in, fan_out), jnp.float32, -bound, bound)
        b = jax.random.uniform(kb, (1, fan_out), jnp.float32, -bound, bound)
        return w, b

    keys = jax.random.split(key, 6)
    wA1, bA1 = linear(keys[0], EMBED_DIM, H1)
    wA2, bA2 = linear(keys[1], H1, H2)
    wA3, bA3 = linear(keys[2], H2, TASK_A_LABELS)
    wB1, bB1 = linear(keys[3], EMBED_DIM, H1)
    wB2, bB2 = linear(keys[4], H1, H2)
    wB3, bB3 = linear(keys[5], H2, TASK_B_LABELS)
    return (wA1, bA1, wA2, bA2, wA3, bA3, wB1, bB1, wB2, bB2, wB3, bB3)


def reference_forward(x, params, compute_dtype=jnp.float32):
    """Pure-JAX reference of the module math; compute_dtype mirrors the kernel's casts."""
    (wA1, bA1, wA2, bA2, wA3, bA3, wB1, bB1, wB2, bB2, wB3, bB3) = params
    emb = x * jax.lax.rsqrt(jnp.sum(x * x, axis=-1, keepdims=True) + NORM_EPS)

    def head(w1, b1, w2, b2, w3, b3):
        c = lambda a: a.astype(compute_dtype)
        h = jnp.maximum(jnp.dot(c(emb), c(w1), preferred_element_type=jnp.float32) + b1, 0.0)
        h = jnp.maximum(jnp.dot(c(h), c(w2), preferred_element_type=jnp.float32) + b2, 0.0)
        return jnp.dot(c(h), c(w3), preferred_element_type=jnp.float32) + b3

    return (head(wA1, bA1, wA2, bA2, wA3, bA3),
            head(wB1, bB1, wB2, bB2, wB3, bB3))


if __name__ == "__main__":
    key = jax.random.PRNGKey(0)
    k_x, k_p = jax.random.split(key)
    params = init_params(k_p)

    # Small demo batch of "sentences" (backbone projection outputs).
    B = 8
    x = jax.random.normal(k_x, (B, EMBED_DIM), jnp.float32)

    logitsA, logitsB = jax.block_until_ready(multitask_forward(x, params))
    assert logitsA.shape == (B, TASK_A_LABELS) and logitsB.shape == (B, TASK_B_LABELS)

    # Tight check vs. a reference mirroring the kernel's bf16 matmul operands.
    refA_mix, refB_mix = reference_forward(x, params, compute_dtype=jnp.bfloat16)
    assert jnp.allclose(logitsA, refA_mix, atol=2e-3, rtol=2e-3)
    assert jnp.allclose(logitsB, refB_mix, atol=2e-3, rtol=2e-3)

    # Looser check vs. the pure-f32 PyTorch-equivalent math (bf16 rounding only).
    refA, refB = reference_forward(x, params)
    assert jnp.allclose(logitsA, refA, atol=2e-2, rtol=2e-2)
    assert jnp.allclose(logitsB, refB, atol=2e-2, rtol=2e-2)

    # Ragged / larger batch exercising the padding path and a multi-step parallel grid.
    B2 = 300
    x2 = jax.random.normal(k_x, (B2, EMBED_DIM), jnp.float32)
    logitsA2, logitsB2 = jax.block_until_ready(multitask_forward(x2, params, tile_b=256))
    refA2, refB2 = reference_forward(x2, params)
    assert logitsA2.shape == (B2, TASK_A_LABELS) and logitsB2.shape == (B2, TASK_B_LABELS)
    assert jnp.allclose(logitsA2, refA2, atol=2e-2, rtol=2e-2)
    assert jnp.allclose(logitsB2, refB2, atol=2e-2, rtol=2e-2)

    print("KERNEL_OK")
</pallas_src>

<mosaic_0001>
module attributes {stable_mosaic.version = 11 : i64} {
  func.func @_mtl_heads_kernel(%arg0: i32, %arg1: memref<8x256xf32, #tpu.memory_space<vmem>>, %arg2: memref<256x256xbf16, #tpu.memory_space<vmem>>, %arg3: memref<1x256xf32, #tpu.memory_space<vmem>>, %arg4: memref<256x128xbf16, #tpu.memory_space<vmem>>, %arg5: memref<1x128xf32, #tpu.memory_space<vmem>>, %arg6: memref<128x128xbf16, #tpu.memory_space<vmem>>, %arg7: memref<1x128xf32, #tpu.memory_space<vmem>>, %arg8: memref<8x128xf32, #tpu.memory_space<vmem>>) attributes {dimension_semantics = [#tpu.dimension_semantics<parallel>], iteration_bounds = array<i64: 1>, scalar_prefetch = 0 : i64, scratch_operands = 0 : i64, tpu.core_type = #tpu.core_type<tc>, window_params = [{transform_indices = @transform_0, window_bounds = array<i64: 8, 256>}, {pipeline_mode = #tpu.pipeline_mode<synchronous>, transform_indices = @transform_1, window_bounds = array<i64: 256, 256>}, {pipeline_mode = #tpu.pipeline_mode<synchronous>, transform_indices = @transform_2, window_bounds = array<i64: 1, 256>}, {pipeline_mode = #tpu.pipeline_mode<synchronous>, transform_indices = @transform_3, window_bounds = array<i64: 256, 128>}, {pipeline_mode = #tpu.pipeline_mode<synchronous>, transform_indices = @transform_4, window_bounds = array<i64: 1, 128>}, {pipeline_mode = #tpu.pipeline_mode<synchronous>, transform_indices = @transform_5, window_bounds = array<i64: 128, 128>}, {pipeline_mode = #tpu.pipeline_mode<synchronous>, transform_indices = @transform_6, window_bounds = array<i64: 1, 128>}, {transform_indices = @transform_7, window_bounds = array<i64: 8, 128>}]} {
    %c0 = arith.constant 0 : index
    %c0_0 = arith.constant 0 : index
    %0 = vector.load %arg1[%c0, %c0_0] : memref<8x256xf32, #tpu.memory_space<vmem>>, vector<8x256xf32>
    %1 = arith.mulf %0, %0 : vector<8x256xf32>
    %cst = arith.constant dense<0.000000e+00> : vector<8xf32>
    %2 = vector.multi_reduction <add>, %1, %cst [1] : vector<8x256xf32> to vector<8xf32>
    %3 = vector.shape_cast %2 : vector<8xf32> to vector<8x1xf32>
    %cst_1 = arith.constant 9.99999996E-13 : f32
    %4 = vector.broadcast %cst_1 : f32 to vector<8x1xf32>
    %5 = arith.addf %3, %4 : vector<8x1xf32>
    %6 = math.rsqrt %5 : vector<8x1xf32>
    %7 = vector.broadcast %6 : vector<8x1xf32> to vector<8x256xf32>
    %8 = arith.mulf %0, %7 : vector<8x256xf32>
    %9 = arith.truncf %8 : vector<8x256xf32> to vector<8x256xbf16>
    %c0_2 = arith.constant 0 : index
    %c0_3 = arith.constant 0 : index
    %10 = vector.load %arg2[%c0_2, %c0_3] : memref<256x256xbf16, #tpu.memory_space<vmem>>, vector<256x256xbf16>
    %cst_4 = arith.constant dense<0.000000e+00> : vector<8x256xf32>
    %11 = tpu.matmul %9, %10, %cst_4 {dimension_numbers = #tpu.dot_dimension_numbers<[1], [0], [0], [1], [0, 0, 1, 1], [], []>} : vector<8x256xbf16>, vector<256x256xbf16>, vector<8x256xf32> -> vector<8x256xf32>
    %c0_5 = arith.constant 0 : index
    %c0_6 = arith.constant 0 : index
    %12 = vector.load %arg3[%c0_5, %c0_6] : memref<1x256xf32, #tpu.memory_space<vmem>>, vector<1x256xf32>
    %13 = vector.broadcast %12 : vector<1x256xf32> to vector<8x256xf32>
    %14 = arith.addf %11, %13 : vector<8x256xf32>
    %cst_7 = arith.constant 0.000000e+00 : f32
    %15 = vector.broadcast %cst_7 : f32 to vector<8x256xf32>
    %16 = arith.maximumf %14, %15 : vector<8x256xf32>
    %17 = arith.truncf %16 : vector<8x256xf32> to vector<8x256xbf16>
    %c0_8 = arith.constant 0 : index
    %c0_9 = arith.constant 0 : index
    %18 = vector.load %arg4[%c0_8, %c0_9] : memref<256x128xbf16, #tpu.memory_space<vmem>>, vector<256x128xbf16>
    %cst_10 = arith.constant dense<0.000000e+00> : vector<8x128xf32>
    %19 = tpu.matmul %17, %18, %cst_10 {dimension_numbers = #tpu.dot_dimension_numbers<[1], [0], [0], [1], [0, 0, 1, 1], [], []>} : vector<8x256xbf16>, vector<256x128xbf16>, vector<8x128xf32> -> vector<8x128xf32>
    %c0_11 = arith.constant 0 : index
    %c0_12 = arith.constant 0 : index
    %20 = vector.load %arg5[%c0_11, %c0_12] : memref<1x128xf32, #tpu.memory_space<vmem>>, vector<1x128xf32>
    %21 = vector.broadcast %20 : vector<1x128xf32> to vector<8x128xf32>
    %22 = arith.addf %19, %21 : vector<8x128xf32>
    %cst_13 = arith.constant 0.000000e+00 : f32
    %23 = vector.broadcast %cst_13 : f32 to vector<8x128xf32>
    %24 = arith.maximumf %22, %23 : vector<8x128xf32>
    %25 = arith.truncf %24 : vector<8x128xf32> to vector<8x128xbf16>
    %c0_14 = arith.constant 0 : index
    %c0_15 = arith.constant 0 : index
    %26 = vector.load %arg6[%c0_14, %c0_15] : memref<128x128xbf16, #tpu.memory_space<vmem>>, vector<128x128xbf16>
    %cst_16 = arith.constant dense<0.000000e+00> : vector<8x128xf32>
    %27 = tpu.matmul %25, %26, %cst_16 {dimension_numbers = #tpu.dot_dimension_numbers<[1], [0], [0], [1], [0, 0, 1, 1], [], []>} : vector<8x128xbf16>, vector<128x128xbf16>, vector<8x128xf32> -> vector<8x128xf32>
    %c0_17 = arith.constant 0 : index
    %c0_18 = arith.constant 0 : index
    %28 = vector.load %arg7[%c0_17, %c0_18] : memref<1x128xf32, #tpu.memory_space<vmem>>, vector<1x128xf32>
    %29 = vector.broadcast %28 : vector<1x128xf32> to vector<8x128xf32>
    %30 = arith.addf %27, %29 : vector<8x128xf32>
    %c0_19 = arith.constant 0 : index
    %c0_20 = arith.constant 0 : index
    %31 = vector.load %arg8[%c0_19, %c0_20] : memref<8x128xf32, #tpu.memory_space<vmem>>, vector<8x128xf32>
    tpu.vector_store %arg8[%c0_19, %c0_20], %30 {strides = array<i32>} : memref<8x128xf32, #tpu.memory_space<vmem>>, vector<8x128xf32>,
    return
  }
  func.func @transform_0(%arg0: i32) -> (i32, i32) {
    %c0_i32 = arith.constant 0 : i32
    %c0_i32_0 = arith.constant 0 : i32
    return %arg0, %c0_i32 : i32, i32
  }
  func.func @transform_1(%arg0: i32) -> (i32, i32) {
    %c0_i32 = arith.constant 0 : i32
    %c0_i32_0 = arith.constant 0 : i32
    %c0_i32_1 = arith.constant 0 : i32
    return %c0_i32, %c0_i32_0 : i32, i32
  }
  func.func @transform_2(%arg0: i32) -> (i32, i32) {
    %c0_i32 = arith.constant 0 : i32
    %c0_i32_0 = arith.constant 0 : i32
    %c0_i32_1 = arith.constant 0 : i32
    return %c0_i32, %c0_i32_0 : i32, i32
  }
  func.func @transform_3(%arg0: i32) -> (i32, i32) {
    %c0_i32 = arith.constant 0 : i32
    %c0_i32_0 = arith.constant 0 : i32
    %c0_i32_1 = arith.constant 0 : i32
    return %c0_i32, %c0_i32_0 : i32, i32
  }
  func.func @transform_4(%arg0: i32) -> (i32, i32) {
    %c0_i32 = arith.constant 0 : i32
    %c0_i32_0 = arith.constant 0 : i32
    %c0_i32_1 = arith.constant 0 : i32
    return %c0_i32, %c0_i32_0 : i32, i32
  }
  func.func @transform_5(%arg0: i32) -> (i32, i32) {
    %c0_i32 = arith.constant 0 : i32
    %c0_i32_0 = arith.constant 0 : i32
    %c0_i32_1 = arith.constant 0 : i32
    return %c0_i32, %c0_i32_0 : i32, i32
  }
  func.func @transform_6(%arg0: i32) -> (i32, i32) {
    %c0_i32 = arith.constant 0 : i32
    %c0_i32_0 = arith.constant 0 : i32
    %c0_i32_1 = arith.constant 0 : i32
    return %c0_i32, %c0_i32_0 : i32, i32
  }
  func.func @transform_7(%arg0: i32) -> (i32, i32) {
    %c0_i32 = arith.constant 0 : i32
    %c0_i32_0 = arith.constant 0 : i32
    return %arg0, %c0_i32 : i32, i32
  }
}

</mosaic_0001>

<llo_original>
// kernel: multitask_forward.1
$region0: #{multitask_forward.1}
  #allocation0 [shape = 'u32[]', space=smem, size = 0x4, offset = 0x4, fixed_abs, tag = 'smem constant byte address 0x4 - core index']
  #allocation1 [shape = 'u32[144,128]{1,0:T(1,128)}', space=vmem, size = 0x12000, scoped, tag = 'internal scratch']
  %s0 = inlined_call_operand.vmem [shape: f32[8,256], index: 0, kind: input, shape index: {}]
  %s1 = inlined_call_operand.vmem [shape: bf16[256,256], index: 1, kind: input, shape index: {}]
  %s2 = inlined_call_operand.vmem [shape: f32[1,256], index: 2, kind: input, shape index: {}]
  %s3 = inlined_call_operand.vmem [shape: bf16[256,128], index: 3, kind: input, shape index: {}]
  %s4 = inlined_call_operand.vmem [shape: f32[1,128], index: 4, kind: input, shape index: {}]
  %s5 = inlined_call_operand.vmem [shape: bf16[128,128], index: 5, kind: input, shape index: {}]
  %s6 = inlined_call_operand.vmem [shape: f32[1,128], index: 6, kind: input, shape index: {}]
  %s7 = inlined_call_operand.vmem [shape: f32[8,128], index: 7, kind: output, shape index: {}]
  %s8 = sld [smem:[#allocation0]]
  $region38: #{multitask_forward.1} parent=0
    _
  %s10 = ssub.s32 1, %s8
  %s11 = scalar_select 0, %s10, %s8
  // Predicated region
  $region2: #{multitask_forward.1} parent=0 // pred_check
    _
  $region3: #{multitask_forward.1} parent=0 // pred_check_branch
    %13 = sbr.rel (0) target = $region5
  $region4: #{multitask_forward.1} parent=0 // pred_region
    _
  $region5: #{multitask_forward.1} parent=0 // pred_fallthru
    _
  // Predicated region
  $region6: #{multitask_forward.1} parent=0 // pred_check
    _
  $region7: #{multitask_forward.1} parent=0 // pred_check_branch
    %15 = sbr.rel (0) target = $region9
  $region8: #{multitask_forward.1} parent=0 // pred_region
    _
  $region9: #{multitask_forward.1} parent=0 // pred_fallthru
    _
  // Predicated region
  $region10: #{multitask_forward.1} parent=0 // pred_check
    _
  $region11: #{multitask_forward.1} parent=0 // pred_check_branch
    %17 = sbr.rel (0) target = $region13
  $region12: #{multitask_forward.1} parent=0 // pred_region
    _
  $region13: #{multitask_forward.1} parent=0 // pred_fallthru
    _
  // Predicated region
  $region14: #{multitask_forward.1} parent=0 // pred_check
    _
  $region15: #{multitask_forward.1} parent=0 // pred_check_branch
    %19 = sbr.rel (0) target = $region17
  $region16: #{multitask_forward.1} parent=0 // pred_region
    _
  $region17: #{multitask_forward.1} parent=0 // pred_fallthru
    _
  // Predicated region
  $region18: #{multitask_forward.1} parent=0 // pred_check
    _
  $region19: #{multitask_forward.1} parent=0 // pred_check_branch
    %21 = sbr.rel (0) target = $region21
  $region20: #{multitask_forward.1} parent=0 // pred_region
    _
  $region21: #{multitask_forward.1} parent=0 // pred_fallthru
    _
  // Predicated region
  $region22: #{multitask_forward.1} parent=0 // pred_check
    _
  $region23: #{multitask_forward.1} parent=0 // pred_check_branch
    %23 = sbr.rel (0) target = $region25
  $region24: #{multitask_forward.1} parent=0 // pred_region
    _
  $region25: #{multitask_forward.1} parent=0 // pred_fallthru
    _
  // Predicated region
  $region26: #{multitask_forward.1} parent=0 // pred_check
    _
  $region27: #{multitask_forward.1} parent=0 // pred_check_branch
    %25 = sbr.rel (0) target = $region29
  $region28: #{multitask_forward.1} parent=0 // pred_region
    _
  $region29: #{multitask_forward.1} parent=0 // pred_fallthru
    _
  %v27 = vld [vmem:[%s0] sm:$0xff]
  %v28 = vld [vmem:[%s0 + $0x8] sm:$0xff]
  %v29 = vmul.f32 %v27, %v27
  %v30 = vmul.f32 %v28, %v28
  %v31 = vadd.f32 %v29, %v30
  %32 = vadd.xlane.f32.xlu0 %v31
  %v33 = vpop.xlane.xlu0 %32
  %v34 = vadd.f32 %v33, 1e-12
  %v35 = vrsqrt.pop %v34
  %v36 = vmul.f32 %v27, %v35
  %v37 = vmul.f32 %v28, %v35
  %v38 = vpack.c.bf16 %v36, %v36
  %v39 = vpack.c.bf16 %v37, %v37
  %v40 = vld [vmem:[%s1] sm:$0xff]
  %v41 = vld [vmem:[%s1 + $0x8] sm:$0xff]
  %v42 = vld [vmem:[%s1 + $0x10] sm:$0xff]
  %v43 = vld [vmem:[%s1 + $0x18] sm:$0xff]
  %v44 = vld [vmem:[%s1 + $0x20] sm:$0xff]
  %v45 = vld [vmem:[%s1 + $0x28] sm:$0xff]
  %v46 = vld [vmem:[%s1 + $0x30] sm:$0xff]
  %v47 = vld [vmem:[%s1 + $0x38] sm:$0xff]
  %v48 = vld [vmem:[%s1 + $0x40] sm:$0xff]
  %v49 = vld [vmem:[%s1 + $0x48] sm:$0xff]
  %v50 = vld [vmem:[%s1 + $0x50] sm:$0xff]
  %v51 = vld [vmem:[%s1 + $0x58] sm:$0xff]
  %v52 = vld [vmem:[%s1 + $0x60] sm:$0xff]
  %v53 = vld [vmem:[%s1 + $0x68] sm:$0xff]
  %v54 = vld [vmem:[%s1 + $0x70] sm:$0xff]
  %v55 = vld [vmem:[%s1 + $0x78] sm:$0xff]
  %v56 = vld [vmem:[%s1 + $0x80] sm:$0xff]
  %v57 = vld [vmem:[%s1 + $0x88] sm:$0xff]
  %v58 = vld [vmem:[%s1 + $0x90] sm:$0xff]
  %v59 = vld [vmem:[%s1 + $0x98] sm:$0xff]
  %v60 = vld [vmem:[%s1 + $0xa0] sm:$0xff]
  %v61 = vld [vmem:[%s1 + $0xa8] sm:$0xff]
  %v62 = vld [vmem:[%s1 + $0xb0] sm:$0xff]
  %v63 = vld [vmem:[%s1 + $0xb8] sm:$0xff]
  %v64 = vld [vmem:[%s1 + $0xc0] sm:$0xff]
  %v65 = vld [vmem:[%s1 + $0xc8] sm:$0xff]
  %v66 = vld [vmem:[%s1 + $0xd0] sm:$0xff]
  %v67 = vld [vmem:[%s1 + $0xd8] sm:$0xff]
  %v68 = vld [vmem:[%s1 + $0xe0] sm:$0xff]
  %v69 = vld [vmem:[%s1 + $0xe8] sm:$0xff]
  %v70 = vld [vmem:[%s1 + $0xf0] sm:$0xff]
  %v71 = vld [vmem:[%s1 + $0xf8] sm:$0xff]
  %v72 = vld [vmem:[%s2] sm:$0x3]
  %v74 = vlaneseq
  %v75 = vshrl.u32 %v74, 7
  %v76 = vsub.s32 0, %v75
  %v77 = vrot.slane %v72, %v76
  %v78 = vlaneseq
  %v79 = vshrl.u32 %v78, 7
  %v80 = vsub.s32 1, %v79
  %v81 = vrot.slane %v72, %v80
  %v116 = vunpack.c.l.b16 %v40
  %v117 = vunpack.c.h.b16 %v40
  %v118 = vunpack.c.l.b16 %v41
  %v119 = vunpack.c.h.b16 %v41
  %v120 = vunpack.c.l.b16 %v42
  %v121 = vunpack.c.h.b16 %v42
  %v122 = vunpack.c.l.b16 %v43
  %v123 = vunpack.c.h.b16 %v43
  %v124 = vunpack.c.l.b16 %v44
  %v125 = vunpack.c.h.b16 %v44
  %v126 = vunpack.c.l.b16 %v45
  %v127 = vunpack.c.h.b16 %v45
  %v128 = vunpack.c.l.b16 %v46
  %v129 = vunpack.c.h.b16 %v46
  %v130 = vunpack.c.l.b16 %v47
  %v131 = vunpack.c.h.b16 %v47
  %v132 = vunpack.c.l.b16 %v48
  %v133 = vunpack.c.h.b16 %v48
  %v134 = vunpack.c.l.b16 %v49
  %v135 = vunpack.c.h.b16 %v49
  %v136 = vunpack.c.l.b16 %v50
  %v137 = vunpack.c.h.b16 %v50
  %v138 = vunpack.c.l.b16 %v51
  %v139 = vunpack.c.h.b16 %v51
  %v140 = vunpack.c.l.b16 %v52
  %v141 = vunpack.c.h.b16 %v52
  %v142 = vunpack.c.l.b16 %v53
  %v143 = vunpack.c.h.b16 %v53
  %v144 = vunpack.c.l.b16 %v54
  %v145 = vunpack.c.h.b16 %v54
  %v146 = vunpack.c.l.b16 %v55
  %v147 = vunpack.c.h.b16 %v55
  %v148 = vunpack.c.l.b16 %v56
  %v149 = vunpack.c.h.b16 %v56
  %v150 = vunpack.c.l.b16 %v57
  %v151 = vunpack.c.h.b16 %v57
  %v152 = vunpack.c.l.b16 %v58
  %v153 = vunpack.c.h.b16 %v58
  %v154 = vunpack.c.l.b16 %v59
  %v155 = vunpack.c.h.b16 %v59
  %v156 = vunpack.c.l.b16 %v60
  %v157 = vunpack.c.h.b16 %v60
  %v158 = vunpack.c.l.b16 %v61
  %v159 = vunpack.c.h.b16 %v61
  %v160 = vunpack.c.l.b16 %v62
  %v161 = vunpack.c.h.b16 %v62
  %v162 = vunpack.c.l.b16 %v63
  %v163 = vunpack.c.h.b16 %v63
  %v164 = vunpack.c.l.b16 %v64
  %v165 = vunpack.c.h.b16 %v64
  %v166 = vunpack.c.l.b16 %v65
  %v167 = vunpack.c.h.b16 %v65
  %v168 = vunpack.c.l.b16 %v66
  %v169 = vunpack.c.h.b16 %v66
  %v170 = vunpack.c.l.b16 %v67
  %v171 = vunpack.c.h.b16 %v67
  %v172 = vunpack.c.l.b16 %v68
  %v173 = vunpack.c.h.b16 %v68
  %v174 = vunpack.c.l.b16 %v69
  %v175 = vunpack.c.h.b16 %v69
  %v176 = vunpack.c.l.b16 %v70
  %v177 = vunpack.c.h.b16 %v70
  %v178 = vunpack.c.l.b16 %v71
  %v179 = vunpack.c.h.b16 %v71
  %v180 = vpack.c.b16 %v118, %v116
  %v181 = vpack.c.b16 %v119, %v117
  %v182 = vpack.c.b16 %v122, %v120
  %v183 = vpack.c.b16 %v123, %v121
  %v184 = vpack.c.b16 %v126, %v124
  %v185 = vpack.c.b16 %v127, %v125
  %v186 = vpack.c.b16 %v130, %v128
  %v187 = vpack.c.b16 %v131, %v129
  %v188 = vpack.c.b16 %v134, %v132
  %v189 = vpack.c.b16 %v135, %v133
  %v190 = vpack.c.b16 %v138, %v136
  %v191 = vpack.c.b16 %v139, %v137
  %v192 = vpack.c.b16 %v142, %v140
  %v193 = vpack.c.b16 %v143, %v141
  %v194 = vpack.c.b16 %v146, %v144
  %v195 = vpack.c.b16 %v147, %v145
  %v196 = vpack.c.b16 %v150, %v148
  %v197 = vpack.c.b16 %v151, %v149
  %v198 = vpack.c.b16 %v154, %v152
  %v199 = vpack.c.b16 %v155, %v153
  %v200 = vpack.c.b16 %v158, %v156
  %v201 = vpack.c.b16 %v159, %v157
  %v202 = vpack.c.b16 %v162, %v160
  %v203 = vpack.c.b16 %v163, %v161
  %v204 = vpack.c.b16 %v166, %v164
  %v205 = vpack.c.b16 %v167, %v165
  %v206 = vpack.c.b16 %v170, %v168
  %v207 = vpack.c.b16 %v171, %v169
  %v208 = vpack.c.b16 %v174, %v172
  %v209 = vpack.c.b16 %v175, %v173
  %v210 = vpack.c.b16 %v178, %v176
  %v211 = vpack.c.b16 %v179, %v177
  %244 = vmatprep.subr.bf16.mxu0 %v181
  %245 = vmatpush1.bf16.msra.mxu0 %v180
  %246 = vmatprep.subr.bf16.mxu0 %v183
  %247 = vmatpush1.bf16.msra.mxu0 %v182
  %248 = vmatprep.subr.bf16.mxu0 %v185
  %249 = vmatpush1.bf16.msra.mxu0 %v184
  %250 = vmatprep.subr.bf16.mxu0 %v187
  %251 = vmatpush1.bf16.msra.mxu0 %v186
  %252 = vmatprep.subr.bf16.mxu0 %v189
  %253 = vmatpush1.bf16.msra.mxu0 %v188
  %254 = vmatprep.subr.bf16.mxu0 %v191
  %255 = vmatpush1.bf16.msra.mxu0 %v190
  %256 = vmatprep.subr.bf16.mxu0 %v193
  %257 = vmatpush1.bf16.msra.mxu0 %v192
  %258 = vmatprep.subr.bf16.mxu0 %v195
  %259 = vmatpush1.bf16.msra.mxu0 %v194
  %260 = vmatprep.subr.bf16.mxu0 %v197
  %261 = vmatpush1.bf16.msra.mxu0 %v196
  %262 = vmatprep.subr.bf16.mxu0 %v199
  %263 = vmatpush1.bf16.msra.mxu0 %v198
  %264 = vmatprep.subr.bf16.mxu0 %v201
  %265 = vmatpush1.bf16.msra.mxu0 %v200
  %266 = vmatprep.subr.bf16.mxu0 %v203
  %267 = vmatpush1.bf16.msra.mxu0 %v202
  %268 = vmatprep.subr.bf16.mxu0 %v205
  %269 = vmatpush1.bf16.msra.mxu0 %v204
  %270 = vmatprep.subr.bf16.mxu0 %v207
  %271 = vmatpush1.bf16.msra.mxu0 %v206
  %272 = vmatprep.subr.bf16.mxu0 %v209
  %273 = vmatpush1.bf16.msra.mxu0 %v208
  %274 = vmatprep.subr.bf16.mxu0 %v211
  %275 = vmatpush1.bf16.msra.mxu0 %v210
  %276 = vmatprep.mubr.bf16.mxu0 %v39
  %277 = vmatmul.mubr.bf16.gmra.mrb[0].mxu0 %v38
  %v278 = vpop.f32.mrb[0].mxu0
  %v279 = vadd.f32 %v77, %v278
  %v280 = vpop.f32.mrb[0].mxu0
  %v281 = vadd.f32 %v81, %v280
  %v282 = vpop.f32.mrb[0].mxu0
  %v283 = vpop.f32.mrb[0].mxu0
  %284 = vdwg.mxu0
  %v285 = vmax.f32 %v279, 0.0
  %v286 = vmax.f32 %v281, 0.0
  %v287 = vpack.c.bf16 %v285, %v285
  %v288 = vpack.c.bf16 %v286, %v286
  %v289 = vld [vmem:[%s3] sm:$0xf]
  %v290 = vld [vmem:[%s3 + $0x4] sm:$0xf]
  %v291 = vld [vmem:[%s3 + $0x8] sm:$0xf]
  %v292 = vld [vmem:[%s3 + $0xc] sm:$0xf]
  %v293 = vld [vmem:[%s3 + $0x10] sm:$0xf]
  %v294 = vld [vmem:[%s3 + $0x14] sm:$0xf]
  %v295 = vld [vmem:[%s3 + $0x18] sm:$0xf]
  %v296 = vld [vmem:[%s3 + $0x1c] sm:$0xf]
  %v297 = vld [vmem:[%s3 + $0x20] sm:$0xf]
  %v298 = vld [vmem:[%s3 + $0x24] sm:$0xf]
  %v299 = vld [vmem:[%s3 + $0x28] sm:$0xf]
  %v300 = vld [vmem:[%s3 + $0x2c] sm:$0xf]
  %v301 = vld [vmem:[%s3 + $0x30] sm:$0xf]
  %v302 = vld [vmem:[%s3 + $0x34] sm:$0xf]
  %v303 = vld [vmem:[%s3 + $0x38] sm:$0xf]
  %v304 = vld [vmem:[%s3 + $0x3c] sm:$0xf]
  %v305 = vld [vmem:[%s3 + $0x40] sm:$0xf]
  %v306 = vld [vmem:[%s3 + $0x44] sm:$0xf]
  %v307 = vld [vmem:[%s3 + $0x48] sm:$0xf]
  %v308 = vld [vmem:[%s3 + $0x4c] sm:$0xf]
  %v309 = vld [vmem:[%s3 + $0x50] sm:$0xf]
  %v310 = vld [vmem:[%s3 + $0x54] sm:$0xf]
  %v311 = vld [vmem:[%s3 + $0x58] sm:$0xf]
  %v312 = vld [vmem:[%s3 + $0x5c] sm:$0xf]
  %v313 = vld [vmem:[%s3 + $0x60] sm:$0xf]
  %v314 = vld [vmem:[%s3 + $0x64] sm:$0xf]
  %v315 = vld [vmem:[%s3 + $0x68] sm:$0xf]
  %v316 = vld [vmem:[%s3 + $0x6c] sm:$0xf]
  %v317 = vld [vmem:[%s3 + $0x70] sm:$0xf]
  %v318 = vld [vmem:[%s3 + $0x74] sm:$0xf]
  %v319 = vld [vmem:[%s3 + $0x78] sm:$0xf]
  %v320 = vld [vmem:[%s3 + $0x7c] sm:$0xf]
  %v321 = vld [vmem:[%s4] sm:$0x1]
  %v323 = vlaneseq
  %v324 = vshrl.u32 %v323, 7
  %v325 = vsub.s32 0, %v324
  %v326 = vrot.slane %v321, %v325
  %v360 = vunpack.c.l.b16 %v289
  %v361 = vunpack.c.l.b16 %v290
  %v362 = vunpack.c.l.b16 %v291
  %v363 = vunpack.c.l.b16 %v292
  %v364 = vunpack.c.l.b16 %v293
  %v365 = vunpack.c.l.b16 %v294
  %v366 = vunpack.c.l.b16 %v295
  %v367 = vunpack.c.l.b16 %v296
  %v368 = vunpack.c.l.b16 %v297
  %v369 = vunpack.c.l.b16 %v298
  %v370 = vunpack.c.l.b16 %v299
  %v371 = vunpack.c.l.b16 %v300
  %v372 = vunpack.c.l.b16 %v301
  %v373 = vunpack.c.l.b16 %v302
  %v374 = vunpack.c.l.b16 %v303
  %v375 = vunpack.c.l.b16 %v304
  %v376 = vunpack.c.l.b16 %v305
  %v377 = vunpack.c.l.b16 %v306
  %v378 = vunpack.c.l.b16 %v307
  %v379 = vunpack.c.l.b16 %v308
  %v380 = vunpack.c.l.b16 %v309
  %v381 = vunpack.c.l.b16 %v310
  %v382 = vunpack.c.l.b16 %v311
  %v383 = vunpack.c.l.b16 %v312
  %v384 = vunpack.c.l.b16 %v313
  %v385 = vunpack.c.l.b16 %v314
  %v386 = vunpack.c.l.b16 %v315
  %v387 = vunpack.c.l.b16 %v316
  %v388 = vunpack.c.l.b16 %v317
  %v389 = vunpack.c.l.b16 %v318
  %v390 = vunpack.c.l.b16 %v319
  %v391 = vunpack.c.l.b16 %v320
  %v392 = vpack.c.b16 %v361, %v360
  %v393 = vpack.c.b16 %v363, %v362
  %v394 = vpack.c.b16 %v365, %v364
  %v395 = vpack.c.b16 %v367, %v366
  %v396 = vpack.c.b16 %v369, %v368
  %v397 = vpack.c.b16 %v371, %v370
  %v398 = vpack.c.b16 %v373, %v372
  %v399 = vpack.c.b16 %v375, %v374
  %v400 = vpack.c.b16 %v377, %v376
  %v401 = vpack.c.b16 %v379, %v378
  %v402 = vpack.c.b16 %v381, %v380
  %v403 = vpack.c.b16 %v383, %v382
  %v404 = vpack.c.b16 %v385, %v384
  %v405 = vpack.c.b16 %v387, %v386
  %v406 = vpack.c.b16 %v389, %v388
  %v407 = vpack.c.b16 %v391, %v390
  %424 = vmatprep.subr.bf16.mxu0 0
  %425 = vmatpush1.bf16.msra.mxu0 %v392
  %426 = vmatprep.subr.bf16.mxu0 0
  %427 = vmatpush1.bf16.msra.mxu0 %v393
  %428 = vmatprep.subr.bf16.mxu0 0
  %429 = vmatpush1.bf16.msra.mxu0 %v394
  %430 = vmatprep.subr.bf16.mxu0 0
  %431 = vmatpush1.bf16.msra.mxu0 %v395
  %432 = vmatprep.subr.bf16.mxu0 0
  %433 = vmatpush1.bf16.msra.mxu0 %v396
  %434 = vmatprep.subr.bf16.mxu0 0
  %435 = vmatpush1.bf16.msra.mxu0 %v397
  %436 = vmatprep.subr.bf16.mxu0 0
  %437 = vmatpush1.bf16.msra.mxu0 %v398
  %438 = vmatprep.subr.bf16.mxu0 0
  %439 = vmatpush1.bf16.msra.mxu0 %v399
  %440 = vmatprep.subr.bf16.mxu0 0
  %441 = vmatpush1.bf16.msra.mxu0 %v400
  %442 = vmatprep.subr.bf16.mxu0 0
  %443 = vmatpush1.bf16.msra.mxu0 %v401
  %444 = vmatprep.subr.bf16.mxu0 0
  %445 = vmatpush1.bf16.msra.mxu0 %v402
  %446 = vmatprep.subr.bf16.mxu0 0
  %447 = vmatpush1.bf16.msra.mxu0 %v403
  %448 = vmatprep.subr.bf16.mxu0 0
  %449 = vmatpush1.bf16.msra.mxu0 %v404
  %450 = vmatprep.subr.bf16.mxu0 0
  %451 = vmatpush1.bf16.msra.mxu0 %v405
  %452 = vmatprep.subr.bf16.mxu0 0
  %453 = vmatpush1.bf16.msra.mxu0 %v406
  %454 = vmatprep.subr.bf16.mxu0 0
  %455 = vmatpush1.bf16.msra.mxu0 %v407
  %456 = vmatprep.mubr.bf16.mxu0 %v288
  %457 = vmatmul.mubr.bf16.gmra.mrb[0].mxu0 %v287
  %v458 = vpop.f32.mrb[0].mxu0
  %v459 = vadd.f32 %v326, %v458
  %v460 = vpop.f32.mrb[0].mxu0
  %v461 = vpop.f32.mrb[0].mxu0
  %v462 = vpop.f32.mrb[0].mxu0
  %463 = vdwg.mxu0
  %v464 = vmax.f32 %v459, 0.0
  %v465 = vpack.c.bf16 %v464, %v464
  %v466 = vld [vmem:[%s5] sm:$0xf]
  %v467 = vld [vmem:[%s5 + $0x4] sm:$0xf]
  %v468 = vld [vmem:[%s5 + $0x8] sm:$0xf]
  %v469 = vld [vmem:[%s5 + $0xc] sm:$0xf]
  %v470 = vld [vmem:[%s5 + $0x10] sm:$0xf]
  %v471 = vld [vmem:[%s5 + $0x14] sm:$0xf]
  %v472 = vld [vmem:[%s5 + $0x18] sm:$0xf]
  %v473 = vld [vmem:[%s5 + $0x1c] sm:$0xf]
  %v474 = vld [vmem:[%s5 + $0x20] sm:$0xf]
  %v475 = vld [vmem:[%s5 + $0x24] sm:$0xf]
  %v476 = vld [vmem:[%s5 + $0x28] sm:$0xf]
  %v477 = vld [vmem:[%s5 + $0x2c] sm:$0xf]
  %v478 = vld [vmem:[%s5 + $0x30] sm:$0xf]
  %v479 = vld [vmem:[%s5 + $0x34] sm:$0xf]
  %v480 = vld [vmem:[%s5 + $0x38] sm:$0xf]
  %v481 = vld [vmem:[%s5 + $0x3c] sm:$0xf]
  %v482 = vld [vmem:[%s6] sm:$0x1]
  %v484 = vlaneseq
  %v485 = vshrl.u32 %v484, 7
  %v486 = vsub.s32 0, %v485
  %v487 = vrot.slane %v482, %v486
  %v505 = vunpack.c.l.b16 %v466
  %v506 = vunpack.c.l.b16 %v467
  %v507 = vunpack.c.l.b16 %v468
  %v508 = vunpack.c.l.b16 %v469
  %v509 = vunpack.c.l.b16 %v470
  %v510 = vunpack.c.l.b16 %v471
  %v511 = vunpack.c.l.b16 %v472
  %v512 = vunpack.c.l.b16 %v473
  %v513 = vunpack.c.l.b16 %v474
  %v514 = vunpack.c.l.b16 %v475
  %v515 = vunpack.c.l.b16 %v476
  %v516 = vunpack.c.l.b16 %v477
  %v517 = vunpack.c.l.b16 %v478
  %v518 = vunpack.c.l.b16 %v479
  %v519 = vunpack.c.l.b16 %v480
  %v520 = vunpack.c.l.b16 %v481
  %v521 = vpack.c.b16 %v506, %v505
  %v522 = vpack.c.b16 %v508, %v507
  %v523 = vpack.c.b16 %v510, %v509
  %v524 = vpack.c.b16 %v512, %v511
  %v525 = vpack.c.b16 %v514, %v513
  %v526 = vpack.c.b16 %v516, %v515
  %v527 = vpack.c.b16 %v518, %v517
  %v528 = vpack.c.b16 %v520, %v519
  %537 = vmatprep.subr.bf16.mxu0 0
  %538 = vmatpush1.bf16.msra.mxu0 %v521
  %539 = vmatprep.subr.bf16.mxu0 0
  %540 = vmatpush1.bf16.msra.mxu0 %v522
  %541 = vmatprep.subr.bf16.mxu0 0
  %542 = vmatpush1.bf16.msra.mxu0 %v523
  %543 = vmatprep.subr.bf16.mxu0 0
  %544 = vmatpush1.bf16.msra.mxu0 %v524
  %545 = vmatprep.subr.bf16.mxu0 0
  %546 = vmatpush1.bf16.msra.mxu0 %v525
  %547 = vmatprep.subr.bf16.mxu0 0
  %548 = vmatpush1.bf16.msra.mxu0 %v526
  %549 = vmatprep.subr.bf16.mxu0 0
  %550 = vmatpush1.bf16.msra.mxu0 %v527
  %551 = vmatprep.subr.bf16.mxu0 0
  %552 = vmatpush1.bf16.msra.mxu0 %v528
  %553 = vmatprep.subr.bf16.mxu0 0
  %554 = vmatpush1.bf16.msra.mxu0 0
  %555 = vmatprep.subr.bf16.mxu0 0
  %556 = vmatpush1.bf16.msra.mxu0 0
  %557 = vmatprep.subr.bf16.mxu0 0
  %558 = vmatpush1.bf16.msra.mxu0 0
  %559 = vmatprep.subr.bf16.mxu0 0
  %560 = vmatpush1.bf16.msra.mxu0 0
  %561 = vmatprep.subr.bf16.mxu0 0
  %562 = vmatpush1.bf16.msra.mxu0 0
  %563 = vmatprep.subr.bf16.mxu0 0
  %564 = vmatpush1.bf16.msra.mxu0 0
  %565 = vmatprep.subr.bf16.mxu0 0
  %566 = vmatpush1.bf16.msra.mxu0 0
  %567 = vmatprep.subr.bf16.mxu0 0
  %568 = vmatpush1.bf16.msra.mxu0 0
  %569 = vmatprep.mubr.bf16.mxu0 0
  %570 = vmatmul.mubr.bf16.gmra.mrb[0].mxu0 %v465
  %v571 = vpop.f32.mrb[0].mxu0
  %v572 = vadd.f32 %v487, %v571
  %v573 = vpop.f32.mrb[0].mxu0
  %v574 = vpop.f32.mrb[0].mxu0
  %v575 = vpop.f32.mrb[0].mxu0
  %576 = vdwg.mxu0
  %577 = vst [vmem:[%s7] sm:$0xff] %v572
  // Predicated region
  $region30: #{multitask_forward.1} parent=0 // pred_check
    _
  $region31: #{multitask_forward.1} parent=0 // pred_check_branch
    %579 = sbr.rel (0) target = $region33
  $region32: #{multitask_forward.1} parent=0 // pred_region
    _
  $region33: #{multitask_forward.1} parent=0 // pred_fallthru
    _
  // Predicated region
  $region34: #{multitask_forward.1} parent=0 // pred_check
    _
  $region35: #{multitask_forward.1} parent=0 // pred_check_branch
    %581 = sbr.rel (0) target = $region37
  $region36: #{multitask_forward.1} parent=0 // pred_region
    _
  $region37: #{multitask_forward.1} parent=0 // pred_fallthru
    _

</llo_original>
